<compile_context>
chip_gen: v6e
topology: v6e:2x2x1
jax: 0.10.0
libtpu: 0.0.40
codegen_flags: <defaults>
</compile_context>

<pallas_src>
import jax
import jax.numpy as jnp
from jax.experimental import pallas as pl
from jax.experimental.pallas import tpu as pltpu

# Small, deterministic problem size (in_planes == planes so the identity
# residual is valid, matching downsample=None / stride=1). W*C == 128.
N, C, H, W = 2, 8, 16, 16
K = 3
L = W * C          # 128: lane-dense row width
EPS = 1e-5


def make_kernel(nb):
    rows = nb * H

    def basic_block_kernel(x_ref, wb1_ref, wb2_ref, b1_ref, b2_ref, out_ref):
        """One grid step handles `nb` batch elements.

        x_ref   : (nb, H, L)   lane-dense NHWC input rows (L = W*C = 128)
        wb*_ref : (3, L, L)    banded conv weights per ky (BN scale folded)
        b*_ref  : (1, L)       folded BN bias, tiled per W position
        out_ref : (nb, H, L)   lane-dense output
        """
        x = x_ref[...]                                           # (nb, H, L)
        zrow = jnp.zeros((nb, 1, L), jnp.float32)

        def conv(a, wb_ref, b_ref):
            # a: (nb, H, L). Output row h needs input rows h-1, h, h+1
            # (zero rows at the top/bottom realize the H-axis padding; the
            # W-axis padding is baked into the banded weights).
            a_up = jnp.concatenate([zrow, a[:, :-1, :]], axis=1)   # x[h-1]
            a_dn = jnp.concatenate([a[:, 1:, :], zrow], axis=1)    # x[h+1]
            acc = jnp.dot(a_up.reshape(rows, L), wb_ref[0],
                          preferred_element_type=jnp.float32)
            acc += jnp.dot(a.reshape(rows, L), wb_ref[1],
                           preferred_element_type=jnp.float32)
            acc += jnp.dot(a_dn.reshape(rows, L), wb_ref[2],
                           preferred_element_type=jnp.float32)
            return acc + b_ref[...]                                # (rows, L)

        # ---- conv1 (BN scale folded) + bias + relu ----
        y = jnp.maximum(conv(x, wb1_ref, b1_ref), 0.0)
        # ---- conv2 (BN scale folded) + bias ----
        z = conv(y.reshape(nb, H, L), wb2_ref, b2_ref)
        # ---- identity residual + relu, lane-dense store ----
        z = jnp.maximum(z + x.reshape(rows, L), 0.0)
        out_ref[...] = z.reshape(nb, H, L)

    return basic_block_kernel


def fold_bn(gamma, beta, mean, var):
    scale = gamma / jnp.sqrt(var + EPS)
    bias = beta - mean * scale
    return scale, bias


def make_banded_weight(w_oihw, scale):
    """OIHW 3x3 conv weight + folded BN scale -> (3, W*C, W*C) banded matrices.

    band[ky][w_in*C + ci, w_out*C + co] = W[ky, (w_in - w_out) + 1, ci, co]
    for |w_in - w_out| <= 1, else 0 (the clipped band also realizes the
    W-axis zero padding).
    """
    w_hwio = jnp.transpose(w_oihw, (2, 3, 1, 0)).astype(jnp.float32)
    w_hwio = w_hwio * scale[None, None, None, :]     # fold BN scale into Cout
    bands = []
    for ky in range(K):
        b = jnp.zeros((W, C, W, C), jnp.float32)
        for dx in (-1, 0, 1):
            # S[w_in, w_out] = 1 iff w_in == w_out + dx (clipped at borders).
            s = jnp.eye(W, W, k=-dx, dtype=jnp.float32)
            b = b + jnp.einsum('ab,ij->aibj', s, w_hwio[ky, dx + 1])
        bands.append(b.reshape(L, L))
    return jnp.stack(bands, axis=0)                   # (3, L, L)


def _batch_block():
    # v7x has 2 TensorCores/chip -> keep a size-N "parallel" grid axis.
    # v5e/v6e are single-TC -> merge the batch into a single grid step.
    try:
        kind = jax.devices()[0].device_kind.lower()
    except Exception:
        kind = ""
    return 1 if "v7" in kind else N


def basic_block(x_nchw, w1_oihw, w2_oihw, bn1_params, bn2_params):
    """Wrapper: NCHW in -> NCHW out (kernel runs lane-dense (N, H, W*C))."""
    x_rows = jnp.transpose(x_nchw, (0, 2, 3, 1)).astype(jnp.float32)
    x_rows = x_rows.reshape(N, H, L)                  # lane-dense input

    s1, b1 = fold_bn(*bn1_params)
    s2, b2 = fold_bn(*bn2_params)

    wb1 = make_banded_weight(w1_oihw, s1)             # (3, 128, 128)
    wb2 = make_banded_weight(w2_oihw, s2)             # (3, 128, 128)
    b1t = jnp.tile(b1.astype(jnp.float32), W).reshape(1, L)
    b2t = jnp.tile(b2.astype(jnp.float32), W).reshape(1, L)

    nb = _batch_block()

    out = pl.pallas_call(
        make_kernel(nb),
        out_shape=jax.ShapeDtypeStruct((N, H, L), jnp.float32),
        grid_spec=pltpu.PrefetchScalarGridSpec(
            num_scalar_prefetch=0,
            grid=(N // nb,),
            in_specs=[
                pl.BlockSpec((nb, H, L), lambda n: (n, 0, 0)),
                pl.BlockSpec((K, L, L), lambda n: (0, 0, 0)),
                pl.BlockSpec((K, L, L), lambda n: (0, 0, 0)),
                pl.BlockSpec((1, L), lambda n: (0, 0)),
                pl.BlockSpec((1, L), lambda n: (0, 0)),
            ],
            out_specs=pl.BlockSpec((nb, H, L), lambda n: (n, 0, 0)),
        ),
        compiler_params=pltpu.CompilerParams(
            dimension_semantics=("parallel",)),
    )(x_rows, wb1, wb2, b1t, b2t)

    out_nhwc = out.reshape(N, H, W, C)
    return jnp.transpose(out_nhwc, (0, 3, 1, 2))


def basic_block_ref(x_nchw, w1_oihw, w2_oihw, bn1_params, bn2_params):
    """Pure-JAX reference (NHWC convs) for correctness checking."""
    x = jnp.transpose(x_nchw, (0, 2, 3, 1)).astype(jnp.float32)
    w1 = jnp.transpose(w1_oihw, (2, 3, 1, 0)).astype(jnp.float32)
    w2 = jnp.transpose(w2_oihw, (2, 3, 1, 0)).astype(jnp.float32)
    s1, b1 = fold_bn(*bn1_params)
    s2, b2 = fold_bn(*bn2_params)
    dn = jax.lax.conv_dimension_numbers(x.shape, w1.shape,
                                        ("NHWC", "HWIO", "NHWC"))
    y = jax.lax.conv_general_dilated(x, w1, (1, 1), "SAME",
                                     dimension_numbers=dn)
    y = jnp.maximum(y * s1.reshape(1, 1, 1, C) + b1.reshape(1, 1, 1, C), 0.0)
    z = jax.lax.conv_general_dilated(y, w2, (1, 1), "SAME",
                                     dimension_numbers=dn)
    z = jnp.maximum(z * s2.reshape(1, 1, 1, C) + b2.reshape(1, 1, 1, C) + x,
                    0.0)
    return jnp.transpose(z, (0, 3, 1, 2))


if __name__ == "__main__":
    key = jax.random.PRNGKey(0)
    keys = jax.random.split(key, 11)

    x = jax.random.normal(keys[0], (N, C, H, W), jnp.float32)           # NCHW
    w1 = jax.random.normal(keys[1], (C, C, K, K), jnp.float32) * 0.1    # OIHW
    w2 = jax.random.normal(keys[2], (C, C, K, K), jnp.float32) * 0.1    # OIHW
    bn1 = (jax.random.normal(keys[3], (C,)) * 0.1 + 1.0,                # gamma
           jax.random.normal(keys[4], (C,)) * 0.1,                      # beta
           jax.random.normal(keys[5], (C,)) * 0.1,                      # running_mean
           jax.nn.softplus(jax.random.normal(keys[6], (C,))) + 0.5)     # running_var
    bn2 = (jax.random.normal(keys[7], (C,)) * 0.1 + 1.0,
           jax.random.normal(keys[8], (C,)) * 0.1,
           jax.random.normal(keys[9], (C,)) * 0.1,
           jax.nn.softplus(jax.random.normal(keys[10], (C,))) + 0.5)

    out = jax.block_until_ready(basic_block(x, w1, w2, bn1, bn2))
    ref = jax.block_until_ready(basic_block_ref(x, w1, w2, bn1, bn2))

    assert out.shape == (N, C, H, W)
    assert jnp.allclose(out, ref, atol=1e-4, rtol=1e-4), (
        float(jnp.max(jnp.abs(out - ref))))
    print("KERNEL_OK")
</pallas_src>

<mosaic_0001>
module attributes {stable_mosaic.version = 11 : i64} {
  func.func @basic_block_kernel(%arg0: i32, %arg1: memref<2x16x128xf32, #tpu.memory_space<vmem>>, %arg2: memref<3x128x128xf32, #tpu.memory_space<vmem>>, %arg3: memref<3x128x128xf32, #tpu.memory_space<vmem>>, %arg4: memref<1x128xf32, #tpu.memory_space<vmem>>, %arg5: memref<1x128xf32, #tpu.memory_space<vmem>>, %arg6: memref<2x16x128xf32, #tpu.memory_space<vmem>>) attributes {dimension_semantics = [#tpu.dimension_semantics<parallel>], iteration_bounds = array<i64: 1>, scalar_prefetch = 0 : i64, scratch_operands = 0 : i64, tpu.core_type = #tpu.core_type<tc>, window_params = [{transform_indices = @transform_0, window_bounds = array<i64: 2, 16, 128>}, {pipeline_mode = #tpu.pipeline_mode<synchronous>, transform_indices = @transform_1, window_bounds = array<i64: 3, 128, 128>}, {pipeline_mode = #tpu.pipeline_mode<synchronous>, transform_indices = @transform_2, window_bounds = array<i64: 3, 128, 128>}, {pipeline_mode = #tpu.pipeline_mode<synchronous>, transform_indices = @transform_3, window_bounds = array<i64: 1, 128>}, {pipeline_mode = #tpu.pipeline_mode<synchronous>, transform_indices = @transform_4, window_bounds = array<i64: 1, 128>}, {transform_indices = @transform_5, window_bounds = array<i64: 2, 16, 128>}]} {
    %c0 = arith.constant 0 : index
    %c0_0 = arith.constant 0 : index
    %c0_1 = arith.constant 0 : index
    %0 = vector.load %arg1[%c0, %c0_0, %c0_1] : memref<2x16x128xf32, #tpu.memory_space<vmem>>, vector<2x16x128xf32>
    %cst = arith.constant 0.000000e+00 : f32
    %1 = vector.broadcast %cst : f32 to vector<2x1x128xf32>
    %2 = vector.extract_strided_slice %0 {offsets = [0, 0, 0], sizes = [2, 15, 128], strides = [1, 1, 1]} : vector<2x16x128xf32> to vector<2x15x128xf32>
    %3 = tpu.concatenate %1, %2 in 1 : vector<2x1x128xf32>, vector<2x15x128xf32> -> vector<2x16x128xf32>
    %4 = vector.extract_strided_slice %0 {offsets = [0, 1, 0], sizes = [2, 15, 128], strides = [1, 1, 1]} : vector<2x16x128xf32> to vector<2x15x128xf32>
    %5 = tpu.concatenate %4, %1 in 1 : vector<2x15x128xf32>, vector<2x1x128xf32> -> vector<2x16x128xf32>
    %6 = vector.shape_cast %3 : vector<2x16x128xf32> to vector<32x128xf32>
    %c0_2 = arith.constant 0 : index
    %c0_3 = arith.constant 0 : index
    %c0_4 = arith.constant 0 : index
    %7 = vector.load %arg2[%c0_2, %c0_3, %c0_4] : memref<3x128x128xf32, #tpu.memory_space<vmem>>, vector<1x128x128xf32>
    %8 = vector.shape_cast %7 : vector<1x128x128xf32> to vector<128x128xf32>
    %cst_5 = arith.constant dense<0.000000e+00> : vector<32x128xf32>
    %9 = tpu.matmul %6, %8, %cst_5 {dimension_numbers = #tpu.dot_dimension_numbers<[1], [0], [0], [1], [0, 0, 1, 1], [], []>} : vector<32x128xf32>, vector<128x128xf32>, vector<32x128xf32> -> vector<32x128xf32>
    %10 = vector.shape_cast %0 : vector<2x16x128xf32> to vector<32x128xf32>
    %c1 = arith.constant 1 : index
    %c0_6 = arith.constant 0 : index
    %c0_7 = arith.constant 0 : index
    %11 = vector.load %arg2[%c1, %c0_6, %c0_7] : memref<3x128x128xf32, #tpu.memory_space<vmem>>, vector<1x128x128xf32>
    %12 = vector.shape_cast %11 : vector<1x128x128xf32> to vector<128x128xf32>
    %cst_8 = arith.constant dense<0.000000e+00> : vector<32x128xf32>
    %13 = tpu.matmul %10, %12, %cst_8 {dimension_numbers = #tpu.dot_dimension_numbers<[1], [0], [0], [1], [0, 0, 1, 1], [], []>} : vector<32x128xf32>, vector<128x128xf32>, vector<32x128xf32> -> vector<32x128xf32>
    %14 = arith.addf %9, %13 : vector<32x128xf32>
    %15 = vector.shape_cast %5 : vector<2x16x128xf32> to vector<32x128xf32>
    %c2 = arith.constant 2 : index
    %c0_9 = arith.constant 0 : index
    %c0_10 = arith.constant 0 : index
    %16 = vector.load %arg2[%c2, %c0_9, %c0_10] : memref<3x128x128xf32, #tpu.memory_space<vmem>>, vector<1x128x128xf32>
    %17 = vector.shape_cast %16 : vector<1x128x128xf32> to vector<128x128xf32>
    %cst_11 = arith.constant dense<0.000000e+00> : vector<32x128xf32>
    %18 = tpu.matmul %15, %17, %cst_11 {dimension_numbers = #tpu.dot_dimension_numbers<[1], [0], [0], [1], [0, 0, 1, 1], [], []>} : vector<32x128xf32>, vector<128x128xf32>, vector<32x128xf32> -> vector<32x128xf32>
    %19 = arith.addf %14, %18 : vector<32x128xf32>
    %c0_12 = arith.constant 0 : index
    %c0_13 = arith.constant 0 : index
    %20 = vector.load %arg4[%c0_12, %c0_13] : memref<1x128xf32, #tpu.memory_space<vmem>>, vector<1x128xf32>
    %21 = vector.broadcast %20 : vector<1x128xf32> to vector<32x128xf32>
    %22 = arith.addf %19, %21 : vector<32x128xf32>
    %cst_14 = arith.constant 0.000000e+00 : f32
    %23 = vector.broadcast %cst_14 : f32 to vector<32x128xf32>
    %24 = arith.maximumf %22, %23 : vector<32x128xf32>
    %25 = vector.shape_cast %24 : vector<32x128xf32> to vector<2x16x128xf32>
    %26 = vector.extract_strided_slice %25 {offsets = [0, 0, 0], sizes = [2, 15, 128], strides = [1, 1, 1]} : vector<2x16x128xf32> to vector<2x15x128xf32>
    %27 = tpu.concatenate %1, %26 in 1 : vector<2x1x128xf32>, vector<2x15x128xf32> -> vector<2x16x128xf32>
    %28 = vector.extract_strided_slice %25 {offsets = [0, 1, 0], sizes = [2, 15, 128], strides = [1, 1, 1]} : vector<2x16x128xf32> to vector<2x15x128xf32>
    %29 = tpu.concatenate %28, %1 in 1 : vector<2x15x128xf32>, vector<2x1x128xf32> -> vector<2x16x128xf32>
    %30 = vector.shape_cast %27 : vector<2x16x128xf32> to vector<32x128xf32>
    %c0_15 = arith.constant 0 : index
    %c0_16 = arith.constant 0 : index
    %c0_17 = arith.constant 0 : index
    %31 = vector.load %arg3[%c0_15, %c0_16, %c0_17] : memref<3x128x128xf32, #tpu.memory_space<vmem>>, vector<1x128x128xf32>
    %32 = vector.shape_cast %31 : vector<1x128x128xf32> to vector<128x128xf32>
    %cst_18 = arith.constant dense<0.000000e+00> : vector<32x128xf32>
    %33 = tpu.matmul %30, %32, %cst_18 {dimension_numbers = #tpu.dot_dimension_numbers<[1], [0], [0], [1], [0, 0, 1, 1], [], []>} : vector<32x128xf32>, vector<128x128xf32>, vector<32x128xf32> -> vector<32x128xf32>
    %34 = vector.shape_cast %25 : vector<2x16x128xf32> to vector<32x128xf32>
    %c1_19 = arith.constant 1 : index
    %c0_20 = arith.constant 0 : index
    %c0_21 = arith.constant 0 : index
    %35 = vector.load %arg3[%c1_19, %c0_20, %c0_21] : memref<3x128x128xf32, #tpu.memory_space<vmem>>, vector<1x128x128xf32>
    %36 = vector.shape_cast %35 : vector<1x128x128xf32> to vector<128x128xf32>
    %cst_22 = arith.constant dense<0.000000e+00> : vector<32x128xf32>
    %37 = tpu.matmul %34, %36, %cst_22 {dimension_numbers = #tpu.dot_dimension_numbers<[1], [0], [0], [1], [0, 0, 1, 1], [], []>} : vector<32x128xf32>, vector<128x128xf32>, vector<32x128xf32> -> vector<32x128xf32>
    %38 = arith.addf %33, %37 : vector<32x128xf32>
    %39 = vector.shape_cast %29 : vector<2x16x128xf32> to vector<32x128xf32>
    %c2_23 = arith.constant 2 : index
    %c0_24 = arith.constant 0 : index
    %c0_25 = arith.constant 0 : index
    %40 = vector.load %arg3[%c2_23, %c0_24, %c0_25] : memref<3x128x128xf32, #tpu.memory_space<vmem>>, vector<1x128x128xf32>
    %41 = vector.shape_cast %40 : vector<1x128x128xf32> to vector<128x128xf32>
    %cst_26 = arith.constant dense<0.000000e+00> : vector<32x128xf32>
    %42 = tpu.matmul %39, %41, %cst_26 {dimension_numbers = #tpu.dot_dimension_numbers<[1], [0], [0], [1], [0, 0, 1, 1], [], []>} : vector<32x128xf32>, vector<128x128xf32>, vector<32x128xf32> -> vector<32x128xf32>
    %43 = arith.addf %38, %42 : vector<32x128xf32>
    %c0_27 = arith.constant 0 : index
    %c0_28 = arith.constant 0 : index
    %44 = vector.load %arg5[%c0_27, %c0_28] : memref<1x128xf32, #tpu.memory_space<vmem>>, vector<1x128xf32>
    %45 = vector.broadcast %44 : vector<1x128xf32> to vector<32x128xf32>
    %46 = arith.addf %43, %45 : vector<32x128xf32>
    %47 = vector.shape_cast %0 : vector<2x16x128xf32> to vector<32x128xf32>
    %48 = arith.addf %46, %47 : vector<32x128xf32>
    %cst_29 = arith.constant 0.000000e+00 : f32
    %49 = vector.broadcast %cst_29 : f32 to vector<32x128xf32>
    %50 = arith.maximumf %48, %49 : vector<32x128xf32>
    %51 = vector.shape_cast %50 : vector<32x128xf32> to vector<2x16x128xf32>
    %c0_30 = arith.constant 0 : index
    %c0_31 = arith.constant 0 : index
    %c0_32 = arith.constant 0 : index
    %52 = vector.load %arg6[%c0_30, %c0_31, %c0_32] : memref<2x16x128xf32, #tpu.memory_space<vmem>>, vector<2x16x128xf32>
    tpu.vector_store %arg6[%c0_30, %c0_31, %c0_32], %51 {strides = array<i32>} : memref<2x16x128xf32, #tpu.memory_space<vmem>>, vector<2x16x128xf32>,
    return
  }
  func.func @transform_0(%arg0: i32) -> (i32, i32, i32) {
    %c0_i32 = arith.constant 0 : i32
    %c0_i32_0 = arith.constant 0 : i32
    %c0_i32_1 = arith.constant 0 : i32
    return %arg0, %c0_i32, %c0_i32_0 : i32, i32, i32
  }
  func.func @transform_1(%arg0: i32) -> (i32, i32, i32) {
    %c0_i32 = arith.constant 0 : i32
    %c0_i32_0 = arith.constant 0 : i32
    %c0_i32_1 = arith.constant 0 : i32
    %c0_i32_2 = arith.constant 0 : i32
    return %c0_i32, %c0_i32_0, %c0_i32_1 : i32, i32, i32
  }
  func.func @transform_2(%arg0: i32) -> (i32, i32, i32) {
    %c0_i32 = arith.constant 0 : i32
    %c0_i32_0 = arith.constant 0 : i32
    %c0_i32_1 = arith.constant 0 : i32
    %c0_i32_2 = arith.constant 0 : i32
    return %c0_i32, %c0_i32_0, %c0_i32_1 : i32, i32, i32
  }
  func.func @transform_3(%arg0: i32) -> (i32, i32) {
    %c0_i32 = arith.constant 0 : i32
    %c0_i32_0 = arith.constant 0 : i32
    %c0_i32_1 = arith.constant 0 : i32
    return %c0_i32, %c0_i32_0 : i32, i32
  }
  func.func @transform_4(%arg0: i32) -> (i32, i32) {
    %c0_i32 = arith.constant 0 : i32
    %c0_i32_0 = arith.constant 0 : i32
    %c0_i32_1 = arith.constant 0 : i32
    return %c0_i32, %c0_i32_0 : i32, i32
  }
  func.func @transform_5(%arg0: i32) -> (i32, i32, i32) {
    %c0_i32 = arith.constant 0 : i32
    %c0_i32_0 = arith.constant 0 : i32
    %c0_i32_1 = arith.constant 0 : i32
    return %arg0, %c0_i32, %c0_i32_0 : i32, i32, i32
  }
}

</mosaic_0001>

<llo_original>
// kernel: tpu_custom_call.1
$region0: #{tpu_custom_call.1}
  #allocation0 [shape = 'u32[]', space=smem, size = 0x4, offset = 0x4, fixed_abs, tag = 'smem constant byte address 0x4 - core index']
  #allocation1 [shape = 'u32[144,128]{1,0:T(1,128)}', space=vmem, size = 0x12000, scoped, tag = 'internal scratch']
  %s0 = inlined_call_operand.hbm [shape: f32[2,16,128], index: 0, kind: input, shape index: {}]
  %s1 = inlined_call_operand.hbm [shape: f32[3,128,128], index: 1, kind: input, shape index: {}]
  %s2 = inlined_call_operand.hbm [shape: f32[3,128,128], index: 2, kind: input, shape index: {}]
  %s3 = inlined_call_operand.vmem [shape: f32[1,128], index: 3, kind: input, shape index: {}]
  %s4 = inlined_call_operand.vmem [shape: f32[1,128], index: 4, kind: input, shape index: {}]
  %s5 = inlined_call_operand.hbm [shape: f32[2,16,128], index: 5, kind: output, shape index: {}]
  %s6 = sld [smem:[#allocation0]]
  $region42: #{tpu_custom_call.1} parent=0
    _
  %s8 = ssub.s32 1, %s6
  %s9 = scalar_select 0, %s8, %s6
  $region1: #{tpu_custom_call.1} parent=0
    #allocation2 [shape = 'u8[16384]{0}', space=vmem, size = 0x4000, scoped, tag = 'input window, operand 0, single buffered']
    #allocation3 [shape = 's32[1]{0}', space=sflag, size = 0x4, scoped, tag = 'scoped memory for tpu_custom_call.1']
    #allocation4 [shape = 's32[1]{0}', space=sflag, size = 0x4, scoped, tag = 'scoped memory for tpu_custom_call.1']
    #allocation5 [shape = 'u8[196608]{0}', space=vmem, size = 0x30000, scoped, tag = 'input window, operand 1, single buffered']
    #allocation6 [shape = 's32[1]{0}', space=sflag, size = 0x4, scoped, tag = 'scoped memory for tpu_custom_call.1']
    #allocation7 [shape = 'u8[196608]{0}', space=vmem, size = 0x30000, scoped, tag = 'input window, operand 2, single buffered']
    #allocation8 [shape = 'u8[16384]{0}', space=vmem, size = 0x4000, scoped, tag = 'output window, operand 0, single buffered']
    %10 = vsyncpa [#allocation3], 0
    %11 = vsyncpa [#allocation6], 0
    %12 = vsyncpa [#allocation4], 0
    // Predicated region
    $region2: #{tpu_custom_call.1} parent=1 // pred_check
      _
    $region3: #{tpu_custom_call.1} parent=1 // pred_check_branch
      %14 = sbr.rel (0) target = $region5
    $region4: #{tpu_custom_call.1} parent=1 // pred_region
      %s16 = ssub.s32 512, 512
      %17 = vsyncadd [#allocation3], %s16
      %s18 = sshll.u32 [#allocation2], 4
      %s19 = int_to_ptr.vmem [resolvable:$true] %s18
      %24 = dma.hbm_to_vmem [thread:$0]  %s0, 512, %s19, [#allocation3], 128, 128, 8
    $region5: #{tpu_custom_call.1} parent=1 // pred_fallthru
      _
    // Predicated region
    $region6: #{tpu_custom_call.1} parent=1 // pred_check
      _
    $region7: #{tpu_custom_call.1} parent=1 // pred_check_branch
      %26 = sbr.rel (0) target = $region9
    $region8: #{tpu_custom_call.1} parent=1 // pred_region
      %s28 = ssub.s32 6144, 6144
      %29 = vsyncadd [#allocation6], %s28
      %s30 = sshll.u32 [#allocation5], 4
      %s31 = int_to_ptr.vmem [resolvable:$true] %s30
      %36 = dma.hbm_to_vmem [thread:$0]  %s1, 6144, %s31, [#allocation6], 128, 128, 8
    $region9: #{tpu_custom_call.1} parent=1 // pred_fallthru
      _
    // Predicated region
    $region10: #{tpu_custom_call.1} parent=1 // pred_check
      _
    $region11: #{tpu_custom_call.1} parent=1 // pred_check_branch
      %38 = sbr.rel (0) target = $region13
    $region12: #{tpu_custom_call.1} parent=1 // pred_region
      %s40 = ssub.s32 6144, 6144
      %41 = vsyncadd [#allocation6], %s40
      %s42 = sshll.u32 [#allocation7], 4
      %s43 = int_to_ptr.vmem [resolvable:$true] %s42
      %48 = dma.hbm_to_vmem [thread:$0]  %s2, 6144, %s43, [#allocation6], 128, 128, 8
    $region13: #{tpu_custom_call.1} parent=1 // pred_fallthru
      _
    // Predicated region
    $region14: #{tpu_custom_call.1} parent=1 // pred_check
      _
    $region15: #{tpu_custom_call.1} parent=1 // pred_check_branch
      %50 = sbr.rel (0) target = $region17
    $region16: #{tpu_custom_call.1} parent=1 // pred_region
      _
    $region17: #{tpu_custom_call.1} parent=1 // pred_fallthru
      _
    // Predicated region
    $region18: #{tpu_custom_call.1} parent=1 // pred_check
      _
    $region19: #{tpu_custom_call.1} parent=1 // pred_check_branch
      %52 = sbr.rel (0) target = $region21
    $region20: #{tpu_custom_call.1} parent=1 // pred_region
      _
    $region21: #{tpu_custom_call.1} parent=1 // pred_fallthru
      _
    // Predicated region
    $region22: #{tpu_custom_call.1} parent=1 // pred_check
      _
    $region23: #{tpu_custom_call.1} parent=1 // pred_check_branch
      %54 = sbr.rel (0) target = $region25
    $region24: #{tpu_custom_call.1} parent=1 // pred_region
      %55 = dma.done [#allocation3], 512
    $region25: #{tpu_custom_call.1} parent=1 // pred_fallthru
      _
    // Predicated region
    $region26: #{tpu_custom_call.1} parent=1 // pred_check
      _
    $region27: #{tpu_custom_call.1} parent=1 // pred_check_branch
      %57 = sbr.rel (0) target = $region29
    $region28: #{tpu_custom_call.1} parent=1 // pred_region
      %58 = dma.done [#allocation6], 6144
    $region29: #{tpu_custom_call.1} parent=1 // pred_fallthru
      _
    // Predicated region
    $region30: #{tpu_custom_call.1} parent=1 // pred_check
      _
    $region31: #{tpu_custom_call.1} parent=1 // pred_check_branch
      %60 = sbr.rel (0) target = $region33
    $region32: #{tpu_custom_call.1} parent=1 // pred_region
      %61 = dma.done [#allocation6], 6144
    $region33: #{tpu_custom_call.1} parent=1 // pred_fallthru
      _
    %v62 = vld [vmem:[#allocation2] sm:$0xff]
    %v63 = vld [vmem:[#allocation2 + $0x8] sm:$0xff]
    %v64 = vld [vmem:[#allocation2 + $0x10] sm:$0xff]
    %v65 = vld [vmem:[#allocation2 + $0x18] sm:$0xff]
    %vm70 = vcmask 1040384
    %v71 = vrot.slane %v62, 7
    %v72 = vrot.slane %v63, 7
    %v73 = vsel %vm70, %v71, %v72
    %v74 = vrot.slane %v64, 7
    %v75 = vrot.slane %v65, 7
    %v76 = vsel %vm70, %v74, %v75
    %v81 = vsel %vm70, 0.0, %v71
    %v82 = vsel %vm70, 0.0, %v74
    %vm83 = vcmask 1046528
    %v84 = vrot.slane %v62, 1
    %v85 = vrot.slane %v63, 1
    %v86 = vsel %vm83, %v84, %v85
    %v87 = vrot.slane %v64, 1
    %v88 = vrot.slane %v65, 1
    %v89 = vsel %vm83, %v87, %v88
    %v94 = vsel %vm83, %v85, 0.0
    %v95 = vsel %vm83, %v88, 0.0
    %v96 = vld [vmem:[#allocation5] sm:$0xff]
    %v97 = vld [vmem:[#allocation5 + $0x8] sm:$0xff]
    %v98 = vld [vmem:[#allocation5 + $0x10] sm:$0xff]
    %v99 = vld [vmem:[#allocation5 + $0x18] sm:$0xff]
    %v100 = vld [vmem:[#allocation5 + $0x20] sm:$0xff]
    %v101 = vld [vmem:[#allocation5 + $0x28] sm:$0xff]
    %v102 = vld [vmem:[#allocation5 + $0x30] sm:$0xff]
    %v103 = vld [vmem:[#allocation5 + $0x38] sm:$0xff]
    %v104 = vld [vmem:[#allocation5 + $0x40] sm:$0xff]
    %v105 = vld [vmem:[#allocation5 + $0x48] sm:$0xff]
    %v106 = vld [vmem:[#allocation5 + $0x50] sm:$0xff]
    %v107 = vld [vmem:[#allocation5 + $0x58] sm:$0xff]
    %v108 = vld [vmem:[#allocation5 + $0x60] sm:$0xff]
    %v109 = vld [vmem:[#allocation5 + $0x68] sm:$0xff]
    %v110 = vld [vmem:[#allocation5 + $0x70] sm:$0xff]
    %v111 = vld [vmem:[#allocation5 + $0x78] sm:$0xff]
    %s112 = scalar_lea.vmem [#allocation5], 128
    %v113 = vld [vmem:[%s112] sm:$0xff]
    %v114 = vld [vmem:[%s112 + $0x8] sm:$0xff]
    %v115 = vld [vmem:[%s112 + $0x10] sm:$0xff]
    %v116 = vld [vmem:[%s112 + $0x18] sm:$0xff]
    %v117 = vld [vmem:[%s112 + $0x20] sm:$0xff]
    %v118 = vld [vmem:[%s112 + $0x28] sm:$0xff]
    %v119 = vld [vmem:[%s112 + $0x30] sm:$0xff]
    %v120 = vld [vmem:[%s112 + $0x38] sm:$0xff]
    %v121 = vld [vmem:[%s112 + $0x40] sm:$0xff]
    %v122 = vld [vmem:[%s112 + $0x48] sm:$0xff]
    %v123 = vld [vmem:[%s112 + $0x50] sm:$0xff]
    %v124 = vld [vmem:[%s112 + $0x58] sm:$0xff]
    %v125 = vld [vmem:[%s112 + $0x60] sm:$0xff]
    %v126 = vld [vmem:[%s112 + $0x68] sm:$0xff]
    %v127 = vld [vmem:[%s112 + $0x70] sm:$0xff]
    %v128 = vld [vmem:[%s112 + $0x78] sm:$0xff]
    %129 = vmatprep.subr.mxu0 0.0
    %130 = vmatpush1.msra.mxu0 %v128
    %131 = vmatprep.subr.mxu0 0.0
    %132 = vmatpush1.msra.mxu0 %v127
    %133 = vmatprep.subr.mxu0 0.0
    %134 = vmatpush1.msra.mxu0 %v126
    %135 = vmatprep.subr.mxu0 0.0
    %136 = vmatpush1.msra.mxu0 %v125
    %137 = vmatprep.subr.mxu0 0.0
    %138 = vmatpush1.msra.mxu0 %v124
    %139 = vmatprep.subr.mxu0 0.0
    %140 = vmatpush1.msra.mxu0 %v123
    %141 = vmatprep.subr.mxu0 0.0
    %142 = vmatpush1.msra.mxu0 %v122
    %143 = vmatprep.subr.mxu0 0.0
    %144 = vmatpush1.msra.mxu0 %v121
    %145 = vmatprep.subr.mxu0 0.0
    %146 = vmatpush1.msra.mxu0 %v120
    %147 = vmatprep.subr.mxu0 0.0
    %148 = vmatpush1.msra.mxu0 %v119
    %149 = vmatprep.subr.mxu0 0.0
    %150 = vmatpush1.msra.mxu0 %v118
    %151 = vmatprep.subr.mxu0 0.0
    %152 = vmatpush1.msra.mxu0 %v117
    %153 = vmatprep.subr.mxu0 0.0
    %154 = vmatpush1.msra.mxu0 %v116
    %155 = vmatprep.subr.mxu0 0.0
    %156 = vmatpush1.msra.mxu0 %v115
    %157 = vmatprep.subr.mxu0 0.0
    %158 = vmatpush1.msra.mxu0 %v114
    %159 = vmatprep.subr.mxu0 0.0
    %160 = vmatpush1.msra.mxu0 %v113
    %161 = vmatprep.subr.mxu0 0.0
    %162 = vmatpush2.msra.mxu0 0.0
    %163 = vmatprep.subr.mxu0 0.0
    %164 = vmatpush2.msra.mxu0 0.0
    %165 = vmatprep.subr.mxu0 0.0
    %166 = vmatpush2.msra.mxu0 0.0
    %167 = vmatprep.subr.mxu0 0.0
    %168 = vmatpush2.msra.mxu0 0.0
    %169 = vmatprep.subr.mxu0 0.0
    %170 = vmatpush2.msra.mxu0 0.0
    %171 = vmatprep.subr.mxu0 0.0
    %172 = vmatpush2.msra.mxu0 0.0
    %173 = vmatprep.subr.mxu0 0.0
    %174 = vmatpush2.msra.mxu0 0.0
    %175 = vmatprep.subr.mxu0 0.0
    %176 = vmatpush2.msra.mxu0 0.0
    %177 = vmatprep.subr.mxu0 0.0
    %178 = vmatpush2.msra.mxu0 0.0
    %179 = vmatprep.subr.mxu0 0.0
    %180 = vmatpush2.msra.mxu0 0.0
    %181 = vmatprep.subr.mxu0 0.0
    %182 = vmatpush2.msra.mxu0 0.0
    %183 = vmatprep.subr.mxu0 0.0
    %184 = vmatpush2.msra.mxu0 0.0
    %185 = vmatprep.subr.mxu0 0.0
    %186 = vmatpush2.msra.mxu0 0.0
    %187 = vmatprep.subr.mxu0 0.0
    %188 = vmatpush2.msra.mxu0 0.0
    %189 = vmatprep.subr.mxu0 0.0
    %190 = vmatpush2.msra.mxu0 0.0
    %191 = vmatprep.subr.mxu0 0.0
    %192 = vmatpush2.msra.mxu0 0.0
    %193 = vmatprep.mubr.f32.mxu0 0.0
    %194 = vmatmul.mubr.f32.gmra.mxu0 %v62
    %v195 = vpop.f32.mrf.mxu0
    %v196 = vadd.f32 0.0, %v195
    %v197 = vpop.f32.mrf.mxu0
    %198 = vmatprep.mubr.f32.mxu0 0.0
    %199 = vmatmul.mubr.f32.gmra.mxu0 %v63
    %v200 = vpop.f32.mrf.mxu0
    %v201 = vadd.f32 0.0, %v200
    %v202 = vpop.f32.mrf.mxu0
    %203 = vmatprep.mubr.f32.mxu0 0.0
    %204 = vmatmul.mubr.f32.gmra.mxu0 %v64
    %v205 = vpop.f32.mrf.mxu0
    %v206 = vadd.f32 0.0, %v205
    %v207 = vpop.f32.mrf.mxu0
    %208 = vmatprep.mubr.f32.mxu0 0.0
    %209 = vmatmul.mubr.f32.gmra.mxu0 %v65
    %v210 = vpop.f32.mrf.mxu0
    %v211 = vadd.f32 0.0, %v210
    %v212 = vpop.f32.mrf.mxu0
    %213 = vdwg.mxu0
    %214 = vmatprep.subr.mxu0 0.0
    %215 = vmatpush1.msra.mxu0 %v111
    %216 = vmatprep.subr.mxu0 0.0
    %217 = vmatpush1.msra.mxu0 %v110
    %218 = vmatprep.subr.mxu0 0.0
    %219 = vmatpush1.msra.mxu0 %v109
    %220 = vmatprep.subr.mxu0 0.0
    %221 = vmatpush1.msra.mxu0 %v108
    %222 = vmatprep.subr.mxu0 0.0
    %223 = vmatpush1.msra.mxu0 %v107
    %224 = vmatprep.subr.mxu0 0.0
    %225 = vmatpush1.msra.mxu0 %v106
    %226 = vmatprep.subr.mxu0 0.0
    %227 = vmatpush1.msra.mxu0 %v105
    %228 = vmatprep.subr.mxu0 0.0
    %229 = vmatpush1.msra.mxu0 %v104
    %230 = vmatprep.subr.mxu0 0.0
    %231 = vmatpush1.msra.mxu0 %v103
    %232 = vmatprep.subr.mxu0 0.0
    %233 = vmatpush1.msra.mxu0 %v102
    %234 = vmatprep.subr.mxu0 0.0
    %235 = vmatpush1.msra.mxu0 %v101
    %236 = vmatprep.subr.mxu0 0.0
    %237 = vmatpush1.msra.mxu0 %v100
    %238 = vmatprep.subr.mxu0 0.0
    %239 = vmatpush1.msra.mxu0 %v99
    %240 = vmatprep.subr.mxu0 0.0
    %241 = vmatpush1.msra.mxu0 %v98
    %242 = vmatprep.subr.mxu0 0.0
    %243 = vmatpush1.msra.mxu0 %v97
    %244 = vmatprep.subr.mxu0 0.0
    %245 = vmatpush1.msra.mxu0 %v96
    %246 = vmatprep.subr.mxu0 0.0
    %247 = vmatpush2.msra.mxu0 0.0
    %248 = vmatprep.subr.mxu0 0.0
    %249 = vmatpush2.msra.mxu0 0.0
    %250 = vmatprep.subr.mxu0 0.0
    %251 = vmatpush2.msra.mxu0 0.0
    %252 = vmatprep.subr.mxu0 0.0
    %253 = vmatpush2.msra.mxu0 0.0
    %254 = vmatprep.subr.mxu0 0.0
    %255 = vmatpush2.msra.mxu0 0.0
    %256 = vmatprep.subr.mxu0 0.0
    %257 = vmatpush2.msra.mxu0 0.0
    %258 = vmatprep.subr.mxu0 0.0
    %259 = vmatpush2.msra.mxu0 0.0
    %260 = vmatprep.subr.mxu0 0.0
    %261 = vmatpush2.msra.mxu0 0.0
    %262 = vmatprep.subr.mxu0 0.0
    %263 = vmatpush2.msra.mxu0 0.0
    %264 = vmatprep.subr.mxu0 0.0
    %265 = vmatpush2.msra.mxu0 0.0
    %266 = vmatprep.subr.mxu0 0.0
    %267 = vmatpush2.msra.mxu0 0.0
    %268 = vmatprep.subr.mxu0 0.0
    %269 = vmatpush2.msra.mxu0 0.0
    %270 = vmatprep.subr.mxu0 0.0
    %271 = vmatpush2.msra.mxu0 0.0
    %272 = vmatprep.subr.mxu0 0.0
    %273 = vmatpush2.msra.mxu0 0.0
    %274 = vmatprep.subr.mxu0 0.0
    %275 = vmatpush2.msra.mxu0 0.0
    %276 = vmatprep.subr.mxu0 0.0
    %277 = vmatpush2.msra.mxu0 0.0
    %278 = vmatprep.mubr.f32.mxu0 0.0
    %279 = vmatmul.mubr.f32.gmra.mxu0 %v81
    %v280 = vpop.f32.mrf.mxu0
    %v281 = vadd.f32 %v196, %v280
    %v282 = vpop.f32.mrf.mxu0
    %283 = vmatprep.mubr.f32.mxu0 0.0
    %284 = vmatmul.mubr.f32.gmra.mxu0 %v73
    %v285 = vpop.f32.mrf.mxu0
    %v286 = vadd.f32 %v201, %v285
    %v287 = vpop.f32.mrf.mxu0
    %288 = vmatprep.mubr.f32.mxu0 0.0
    %289 = vmatmul.mubr.f32.gmra.mxu0 %v82
    %v290 = vpop.f32.mrf.mxu0
    %v291 = vadd.f32 %v206, %v290
    %v292 = vpop.f32.mrf.mxu0
    %293 = vmatprep.mubr.f32.mxu0 0.0
    %294 = vmatmul.mubr.f32.gmra.mxu0 %v76
    %v295 = vpop.f32.mrf.mxu0
    %v296 = vadd.f32 %v211, %v295
    %v297 = vpop.f32.mrf.mxu0
    %298 = vdwg.mxu0
    %s299 = scalar_lea.vmem [#allocation5], 256
    %v300 = vld [vmem:[%s299] sm:$0xff]
    %v301 = vld [vmem:[%s299 + $0x8] sm:$0xff]
    %v302 = vld [vmem:[%s299 + $0x10] sm:$0xff]
    %v303 = vld [vmem:[%s299 + $0x18] sm:$0xff]
    %v304 = vld [vmem:[%s299 + $0x20] sm:$0xff]
    %v305 = vld [vmem:[%s299 + $0x28] sm:$0xff]
    %v306 = vld [vmem:[%s299 + $0x30] sm:$0xff]
    %v307 = vld [vmem:[%s299 + $0x38] sm:$0xff]
    %v308 = vld [vmem:[%s299 + $0x40] sm:$0xff]
    %v309 = vld [vmem:[%s299 + $0x48] sm:$0xff]
    %v310 = vld [vmem:[%s299 + $0x50] sm:$0xff]
    %v311 = vld [vmem:[%s299 + $0x58] sm:$0xff]
    %v312 = vld [vmem:[%s299 + $0x60] sm:$0xff]
    %v313 = vld [vmem:[%s299 + $0x68] sm:$0xff]
    %v314 = vld [vmem:[%s299 + $0x70] sm:$0xff]
    %v315 = vld [vmem:[%s299 + $0x78] sm:$0xff]
    %316 = vmatprep.subr.mxu0 0.0
    %317 = vmatpush1.msra.mxu0 %v315
    %318 = vmatprep.subr.mxu0 0.0
    %319 = vmatpush1.msra.mxu0 %v314
    %320 = vmatprep.subr.mxu0 0.0
    %321 = vmatpush1.msra.mxu0 %v313
    %322 = vmatprep.subr.mxu0 0.0
    %323 = vmatpush1.msra.mxu0 %v312
    %324 = vmatprep.subr.mxu0 0.0
    %325 = vmatpush1.msra.mxu0 %v311
    %326 = vmatprep.subr.mxu0 0.0
    %327 = vmatpush1.msra.mxu0 %v310
    %328 = vmatprep.subr.mxu0 0.0
    %329 = vmatpush1.msra.mxu0 %v309
    %330 = vmatprep.subr.mxu0 0.0
    %331 = vmatpush1.msra.mxu0 %v308
    %332 = vmatprep.subr.mxu0 0.0
    %333 = vmatpush1.msra.mxu0 %v307
    %334 = vmatprep.subr.mxu0 0.0
    %335 = vmatpush1.msra.mxu0 %v306
    %336 = vmatprep.subr.mxu0 0.0
    %337 = vmatpush1.msra.mxu0 %v305
    %338 = vmatprep.subr.mxu0 0.0
    %339 = vmatpush1.msra.mxu0 %v304
    %340 = vmatprep.subr.mxu0 0.0
    %341 = vmatpush1.msra.mxu0 %v303
    %342 = vmatprep.subr.mxu0 0.0
    %343 = vmatpush1.msra.mxu0 %v302
    %344 = vmatprep.subr.mxu0 0.0
    %345 = vmatpush1.msra.mxu0 %v301
    %346 = vmatprep.subr.mxu0 0.0
    %347 = vmatpush1.msra.mxu0 %v300
    %348 = vmatprep.subr.mxu0 0.0
    %349 = vmatpush2.msra.mxu0 0.0
    %350 = vmatprep.subr.mxu0 0.0
    %351 = vmatpush2.msra.mxu0 0.0
    %352 = vmatprep.subr.mxu0 0.0
    %353 = vmatpush2.msra.mxu0 0.0
    %354 = vmatprep.subr.mxu0 0.0
    %355 = vmatpush2.msra.mxu0 0.0
    %356 = vmatprep.subr.mxu0 0.0
    %357 = vmatpush2.msra.mxu0 0.0
    %358 = vmatprep.subr.mxu0 0.0
    %359 = vmatpush2.msra.mxu0 0.0
    %360 = vmatprep.subr.mxu0 0.0
    %361 = vmatpush2.msra.mxu0 0.0
    %362 = vmatprep.subr.mxu0 0.0
    %363 = vmatpush2.msra.mxu0 0.0
    %364 = vmatprep.subr.mxu0 0.0
    %365 = vmatpush2.msra.mxu0 0.0
    %366 = vmatprep.subr.mxu0 0.0
    %367 = vmatpush2.msra.mxu0 0.0
    %368 = vmatprep.subr.mxu0 0.0
    %369 = vmatpush2.msra.mxu0 0.0
    %370 = vmatprep.subr.mxu0 0.0
    %371 = vmatpush2.msra.mxu0 0.0
    %372 = vmatprep.subr.mxu0 0.0
    %373 = vmatpush2.msra.mxu0 0.0
    %374 = vmatprep.subr.mxu0 0.0
    %375 = vmatpush2.msra.mxu0 0.0
    %376 = vmatprep.subr.mxu0 0.0
    %377 = vmatpush2.msra.mxu0 0.0
    %378 = vmatprep.subr.mxu0 0.0
    %379 = vmatpush2.msra.mxu0 0.0
    %380 = vmatprep.mubr.f32.mxu0 0.0
    %381 = vmatmul.mubr.f32.gmra.mxu0 %v86
    %v382 = vpop.f32.mrf.mxu0
    %v383 = vadd.f32 0.0, %v382
    %v384 = vpop.f32.mrf.mxu0
    %385 = vmatprep.mubr.f32.mxu0 0.0
    %386 = vmatmul.mubr.f32.gmra.mxu0 %v94
    %v387 = vpop.f32.mrf.mxu0
    %v388 = vadd.f32 0.0, %v387
    %v389 = vpop.f32.mrf.mxu0
    %390 = vmatprep.mubr.f32.mxu0 0.0
    %391 = vmatmul.mubr.f32.gmra.mxu0 %v89
    %v392 = vpop.f32.mrf.mxu0
    %v393 = vadd.f32 0.0, %v392
    %v394 = vpop.f32.mrf.mxu0
    %395 = vmatprep.mubr.f32.mxu0 0.0
    %396 = vmatmul.mubr.f32.gmra.mxu0 %v95
    %v397 = vpop.f32.mrf.mxu0
    %v398 = vadd.f32 0.0, %v397
    %v399 = vpop.f32.mrf.mxu0
    %400 = vdwg.mxu0
    %v401 = vadd.f32 %v281, %v383
    %v402 = vadd.f32 %v286, %v388
    %v403 = vadd.f32 %v291, %v393
    %v404 = vadd.f32 %v296, %v398
    %v405 = vld [vmem:[%s3] sm:$0x1]
    %v407 = vlaneseq
    %v408 = vshrl.u32 %v407, 7
    %v409 = vsub.s32 0, %v408
    %v410 = vrot.slane %v405, %v409
    %v412 = vadd.f32 %v401, %v410
    %v413 = vadd.f32 %v402, %v410
    %v414 = vadd.f32 %v403, %v410
    %v415 = vadd.f32 %v404, %v410
    %v416 = vmax.f32 %v412, 0.0
    %v417 = vmax.f32 %v413, 0.0
    %v418 = vmax.f32 %v414, 0.0
    %v419 = vmax.f32 %v415, 0.0
    %v424 = vrot.slane %v416, 7
    %v425 = vrot.slane %v417, 7
    %v426 = vsel %vm70, %v424, %v425
    %v427 = vrot.slane %v418, 7
    %v428 = vrot.slane %v419, 7
    %v429 = vsel %vm70, %v427, %v428
    %v434 = vsel %vm70, 0.0, %v424
    %v435 = vsel %vm70, 0.0, %v427
    %v436 = vrot.slane %v416, 1
    %v437 = vrot.slane %v417, 1
    %v438 = vsel %vm83, %v436, %v437
    %v439 = vrot.slane %v418, 1
    %v440 = vrot.slane %v419, 1
    %v441 = vsel %vm83, %v439, %v440
    %v446 = vsel %vm83, %v437, 0.0
    %v447 = vsel %vm83, %v440, 0.0
    %v448 = vld [vmem:[#allocation7] sm:$0xff]
    %v449 = vld [vmem:[#allocation7 + $0x8] sm:$0xff]
    %v450 = vld [vmem:[#allocation7 + $0x10] sm:$0xff]
    %v451 = vld [vmem:[#allocation7 + $0x18] sm:$0xff]
    %v452 = vld [vmem:[#allocation7 + $0x20] sm:$0xff]
    %v453 = vld [vmem:[#allocation7 + $0x28] sm:$0xff]
    %v454 = vld [vmem:[#allocation7 + $0x30] sm:$0xff]
    %v455 = vld [vmem:[#allocation7 + $0x38] sm:$0xff]
    %v456 = vld [vmem:[#allocation7 + $0x40] sm:$0xff]
    %v457 = vld [vmem:[#allocation7 + $0x48] sm:$0xff]
    %v458 = vld [vmem:[#allocation7 + $0x50] sm:$0xff]
    %v459 = vld [vmem:[#allocation7 + $0x58] sm:$0xff]
    %v460 = vld [vmem:[#allocation7 + $0x60] sm:$0xff]
    %v461 = vld [vmem:[#allocation7 + $0x68] sm:$0xff]
    %v462 = vld [vmem:[#allocation7 + $0x70] sm:$0xff]
    %v463 = vld [vmem:[#allocation7 + $0x78] sm:$0xff]
    %s464 = scalar_lea.vmem [#allocation7], 128
    %v465 = vld [vmem:[%s464] sm:$0xff]
    %v466 = vld [vmem:[%s464 + $0x8] sm:$0xff]
    %v467 = vld [vmem:[%s464 + $0x10] sm:$0xff]
    %v468 = vld [vmem:[%s464 + $0x18] sm:$0xff]
    %v469 = vld [vmem:[%s464 + $0x20] sm:$0xff]
    %v470 = vld [vmem:[%s464 + $0x28] sm:$0xff]
    %v471 = vld [vmem:[%s464 + $0x30] sm:$0xff]
    %v472 = vld [vmem:[%s464 + $0x38] sm:$0xff]
    %v473 = vld [vmem:[%s464 + $0x40] sm:$0xff]
    %v474 = vld [vmem:[%s464 + $0x48] sm:$0xff]
    %v475 = vld [vmem:[%s464 + $0x50] sm:$0xff]
    %v476 = vld [vmem:[%s464 + $0x58] sm:$0xff]
    %v477 = vld [vmem:[%s464 + $0x60] sm:$0xff]
    %v478 = vld [vmem:[%s464 + $0x68] sm:$0xff]
    %v479 = vld [vmem:[%s464 + $0x70] sm:$0xff]
    %v480 = vld [vmem:[%s464 + $0x78] sm:$0xff]
    %481 = vmatprep.subr.mxu0 0.0
    %482 = vmatpush1.msra.mxu0 %v480
    %483 = vmatprep.subr.mxu0 0.0
    %484 = vmatpush1.msra.mxu0 %v479
    %485 = vmatprep.subr.mxu0 0.0
    %486 = vmatpush1.msra.mxu0 %v478
    %487 = vmatprep.subr.mxu0 0.0
    %488 = vmatpush1.msra.mxu0 %v477
    %489 = vmatprep.subr.mxu0 0.0
    %490 = vmatpush1.msra.mxu0 %v476
    %491 = vmatprep.subr.mxu0 0.0
    %492 = vmatpush1.msra.mxu0 %v475
    %493 = vmatprep.subr.mxu0 0.0
    %494 = vmatpush1.msra.mxu0 %v474
    %495 = vmatprep.subr.mxu0 0.0
    %496 = vmatpush1.msra.mxu0 %v473
    %497 = vmatprep.subr.mxu0 0.0
    %498 = vmatpush1.msra.mxu0 %v472
    %499 = vmatprep.subr.mxu0 0.0
    %500 = vmatpush1.msra.mxu0 %v471
    %501 = vmatprep.subr.mxu0 0.0
    %502 = vmatpush1.msra.mxu0 %v470
    %503 = vmatprep.subr.mxu0 0.0
    %504 = vmatpush1.msra.mxu0 %v469
    %505 = vmatprep.subr.mxu0 0.0
    %506 = vmatpush1.msra.mxu0 %v468
    %507 = vmatprep.subr.mxu0 0.0
    %508 = vmatpush1.msra.mxu0 %v467
    %509 = vmatprep.subr.mxu0 0.0
    %510 = vmatpush1.msra.mxu0 %v466
    %511 = vmatprep.subr.mxu0 0.0
    %512 = vmatpush1.msra.mxu0 %v465
    %513 = vmatprep.subr.mxu0 0.0
    %514 = vmatpush2.msra.mxu0 0.0
    %515 = vmatprep.subr.mxu0 0.0
    %516 = vmatpush2.msra.mxu0 0.0
    %517 = vmatprep.subr.mxu0 0.0
    %518 = vmatpush2.msra.mxu0 0.0
    %519 = vmatprep.subr.mxu0 0.0
    %520 = vmatpush2.msra.mxu0 0.0
    %521 = vmatprep.subr.mxu0 0.0
    %522 = vmatpush2.msra.mxu0 0.0
    %523 = vmatprep.subr.mxu0 0.0
    %524 = vmatpush2.msra.mxu0 0.0
    %525 = vmatprep.subr.mxu0 0.0
    %526 = vmatpush2.msra.mxu0 0.0
    %527 = vmatprep.subr.mxu0 0.0
    %528 = vmatpush2.msra.mxu0 0.0
    %529 = vmatprep.subr.mxu0 0.0
    %530 = vmatpush2.msra.mxu0 0.0
    %531 = vmatprep.subr.mxu0 0.0
    %532 = vmatpush2.msra.mxu0 0.0
    %533 = vmatprep.subr.mxu0 0.0
    %534 = vmatpush2.msra.mxu0 0.0
    %535 = vmatprep.subr.mxu0 0.0
    %536 = vmatpush2.msra.mxu0 0.0
    %537 = vmatprep.subr.mxu0 0.0
    %538 = vmatpush2.msra.mxu0 0.0
    %539 = vmatprep.subr.mxu0 0.0
    %540 = vmatpush2.msra.mxu0 0.0
    %541 = vmatprep.subr.mxu0 0.0
    %542 = vmatpush2.msra.mxu0 0.0
    %543 = vmatprep.subr.mxu0 0.0
    %544 = vmatpush2.msra.mxu0 0.0
    %545 = vmatprep.mubr.f32.mxu0 0.0
    %546 = vmatmul.mubr.f32.gmra.mxu0 %v416
    %v547 = vpop.f32.mrf.mxu0
    %v548 = vadd.f32 0.0, %v547
    %v549 = vpop.f32.mrf.mxu0
    %550 = vmatprep.mubr.f32.mxu0 0.0
    %551 = vmatmul.mubr.f32.gmra.mxu0 %v417
    %v552 = vpop.f32.mrf.mxu0
    %v553 = vadd.f32 0.0, %v552
    %v554 = vpop.f32.mrf.mxu0
    %555 = vmatprep.mubr.f32.mxu0 0.0
    %556 = vmatmul.mubr.f32.gmra.mxu0 %v418
    %v557 = vpop.f32.mrf.mxu0
    %v558 = vadd.f32 0.0, %v557
    %v559 = vpop.f32.mrf.mxu0
    %560 = vmatprep.mubr.f32.mxu0 0.0
    %561 = vmatmul.mubr.f32.gmra.mxu0 %v419
    %v562 = vpop.f32.mrf.mxu0
    %v563 = vadd.f32 0.0, %v562
    %v564 = vpop.f32.mrf.mxu0
    %565 = vdwg.mxu0
    %566 = vmatprep.subr.mxu0 0.0
    %567 = vmatpush1.msra.mxu0 %v463
    %568 = vmatprep.subr.mxu0 0.0
    %569 = vmatpush1.msra.mxu0 %v462
    %570 = vmatprep.subr.mxu0 0.0
    %571 = vmatpush1.msra.mxu0 %v461
    %572 = vmatprep.subr.mxu0 0.0
    %573 = vmatpush1.msra.mxu0 %v460
    %574 = vmatprep.subr.mxu0 0.0
    %575 = vmatpush1.msra.mxu0 %v459
    %576 = vmatprep.subr.mxu0 0.0
    %577 = vmatpush1.msra.mxu0 %v458
    %578 = vmatprep.subr.mxu0 0.0
    %579 = vmatpush1.msra.mxu0 %v457
    %580 = vmatprep.subr.mxu0 0.0
    %581 = vmatpush1.msra.mxu0 %v456
    %582 = vmatprep.subr.mxu0 0.0
    %583 = vmatpush1.msra.mxu0 %v455
    %584 = vmatprep.subr.mxu0 0.0
    %585 = vmatpush1.msra.mxu0 %v454
    %586 = vmatprep.subr.mxu0 0.0
    %587 = vmatpush1.msra.mxu0 %v453
    %588 = vmatprep.subr.mxu0 0.0
    %589 = vmatpush1.msra.mxu0 %v452
    %590 = vmatprep.subr.mxu0 0.0
    %591 = vmatpush1.msra.mxu0 %v451
    %592 = vmatprep.subr.mxu0 0.0
    %593 = vmatpush1.msra.mxu0 %v450
    %594 = vmatprep.subr.mxu0 0.0
    %595 = vmatpush1.msra.mxu0 %v449
    %596 = vmatprep.subr.mxu0 0.0
    %597 = vmatpush1.msra.mxu0 %v448
    %598 = vmatprep.subr.mxu0 0.0
    %599 = vmatpush2.msra.mxu0 0.0
    %600 = vmatprep.subr.mxu0 0.0
    %601 = vmatpush2.msra.mxu0 0.0
    %602 = vmatprep.subr.mxu0 0.0
    %603 = vmatpush2.msra.mxu0 0.0
    %604 = vmatprep.subr.mxu0 0.0
    %605 = vmatpush2.msra.mxu0 0.0
    %606 = vmatprep.subr.mxu0 0.0
    %607 = vmatpush2.msra.mxu0 0.0
    %608 = vmatprep.subr.mxu0 0.0
    %609 = vmatpush2.msra.mxu0 0.0
    %610 = vmatprep.subr.mxu0 0.0
    %611 = vmatpush2.msra.mxu0 0.0
    %612 = vmatprep.subr.mxu0 0.0
    %613 = vmatpush2.msra.mxu0 0.0
    %614 = vmatprep.subr.mxu0 0.0
    %615 = vmatpush2.msra.mxu0 0.0
    %616 = vmatprep.subr.mxu0 0.0
    %617 = vmatpush2.msra.mxu0 0.0
    %618 = vmatprep.subr.mxu0 0.0
    %619 = vmatpush2.msra.mxu0 0.0
    %620 = vmatprep.subr.mxu0 0.0
    %621 = vmatpush2.msra.mxu0 0.0
    %622 = vmatprep.subr.mxu0 0.0
    %623 = vmatpush2.msra.mxu0 0.0
    %624 = vmatprep.subr.mxu0 0.0
    %625 = vmatpush2.msra.mxu0 0.0
    %626 = vmatprep.subr.mxu0 0.0
    %627 = vmatpush2.msra.mxu0 0.0
    %628 = vmatprep.subr.mxu0 0.0
    %629 = vmatpush2.msra.mxu0 0.0
    %630 = vmatprep.mubr.f32.mxu0 0.0
    %631 = vmatmul.mubr.f32.gmra.mxu0 %v434
    %v632 = vpop.f32.mrf.mxu0
    %v633 = vadd.f32 %v548, %v632
    %v634 = vpop.f32.mrf.mxu0
    %635 = vmatprep.mubr.f32.mxu0 0.0
    %636 = vmatmul.mubr.f32.gmra.mxu0 %v426
    %v637 = vpop.f32.mrf.mxu0
    %v638 = vadd.f32 %v553, %v637
    %v639 = vpop.f32.mrf.mxu0
    %640 = vmatprep.mubr.f32.mxu0 0.0
    %641 = vmatmul.mubr.f32.gmra.mxu0 %v435
    %v642 = vpop.f32.mrf.mxu0
    %v643 = vadd.f32 %v558, %v642
    %v644 = vpop.f32.mrf.mxu0
    %645 = vmatprep.mubr.f32.mxu0 0.0
    %646 = vmatmul.mubr.f32.gmra.mxu0 %v429
    %v647 = vpop.f32.mrf.mxu0
    %v648 = vadd.f32 %v563, %v647
    %v649 = vpop.f32.mrf.mxu0
    %650 = vdwg.mxu0
    %s651 = scalar_lea.vmem [#allocation7], 256
    %v652 = vld [vmem:[%s651] sm:$0xff]
    %v653 = vld [vmem:[%s651 + $0x8] sm:$0xff]
    %v654 = vld [vmem:[%s651 + $0x10] sm:$0xff]
    %v655 = vld [vmem:[%s651 + $0x18] sm:$0xff]
    %v656 = vld [vmem:[%s651 + $0x20] sm:$0xff]
    %v657 = vld [vmem:[%s651 + $0x28] sm:$0xff]
    %v658 = vld [vmem:[%s651 + $0x30] sm:$0xff]
    %v659 = vld [vmem:[%s651 + $0x38] sm:$0xff]
    %v660 = vld [vmem:[%s651 + $0x40] sm:$0xff]
    %v661 = vld [vmem:[%s651 + $0x48] sm:$0xff]
    %v662 = vld [vmem:[%s651 + $0x50] sm:$0xff]
    %v663 = vld [vmem:[%s651 + $0x58] sm:$0xff]
    %v664 = vld [vmem:[%s651 + $0x60] sm:$0xff]
    %v665 = vld [vmem:[%s651 + $0x68] sm:$0xff]
    %v666 = vld [vmem:[%s651 + $0x70] sm:$0xff]
    %v667 = vld [vmem:[%s651 + $0x78] sm:$0xff]
    %668 = vmatprep.subr.mxu0 0.0
    %669 = vmatpush1.msra.mxu0 %v667
    %670 = vmatprep.subr.mxu0 0.0
    %671 = vmatpush1.msra.mxu0 %v666
    %672 = vmatprep.subr.mxu0 0.0
    %673 = vmatpush1.msra.mxu0 %v665
    %674 = vmatprep.subr.mxu0 0.0
    %675 = vmatpush1.msra.mxu0 %v664
    %676 = vmatprep.subr.mxu0 0.0
    %677 = vmatpush1.msra.mxu0 %v663
    %678 = vmatprep.subr.mxu0 0.0
    %679 = vmatpush1.msra.mxu0 %v662
    %680 = vmatprep.subr.mxu0 0.0
    %681 = vmatpush1.msra.mxu0 %v661
    %682 = vmatprep.subr.mxu0 0.0
    %683 = vmatpush1.msra.mxu0 %v660
    %684 = vmatprep.subr.mxu0 0.0
    %685 = vmatpush1.msra.mxu0 %v659
    %686 = vmatprep.subr.mxu0 0.0
    %687 = vmatpush1.msra.mxu0 %v658
    %688 = vmatprep.subr.mxu0 0.0
    %689 = vmatpush1.msra.mxu0 %v657
    %690 = vmatprep.subr.mxu0 0.0
    %691 = vmatpush1.msra.mxu0 %v656
    %692 = vmatprep.subr.mxu0 0.0
    %693 = vmatpush1.msra.mxu0 %v655
    %694 = vmatprep.subr.mxu0 0.0
    %695 = vmatpush1.msra.mxu0 %v654
    %696 = vmatprep.subr.mxu0 0.0
    %697 = vmatpush1.msra.mxu0 %v653
    %698 = vmatprep.subr.mxu0 0.0
    %699 = vmatpush1.msra.mxu0 %v652
    %700 = vmatprep.subr.mxu0 0.0
    %701 = vmatpush2.msra.mxu0 0.0
    %702 = vmatprep.subr.mxu0 0.0
    %703 = vmatpush2.msra.mxu0 0.0
    %704 = vmatprep.subr.mxu0 0.0
    %705 = vmatpush2.msra.mxu0 0.0
    %706 = vmatprep.subr.mxu0 0.0
    %707 = vmatpush2.msra.mxu0 0.0
    %708 = vmatprep.subr.mxu0 0.0
    %709 = vmatpush2.msra.mxu0 0.0
    %710 = vmatprep.subr.mxu0 0.0
    %711 = vmatpush2.msra.mxu0 0.0
    %712 = vmatprep.subr.mxu0 0.0
    %713 = vmatpush2.msra.mxu0 0.0
    %714 = vmatprep.subr.mxu0 0.0
    %715 = vmatpush2.msra.mxu0 0.0
    %716 = vmatprep.subr.mxu0 0.0
    %717 = vmatpush2.msra.mxu0 0.0
    %718 = vmatprep.subr.mxu0 0.0
    %719 = vmatpush2.msra.mxu0 0.0
    %720 = vmatprep.subr.mxu0 0.0
    %721 = vmatpush2.msra.mxu0 0.0
    %722 = vmatprep.subr.mxu0 0.0
    %723 = vmatpush2.msra.mxu0 0.0
    %724 = vmatprep.subr.mxu0 0.0
    %725 = vmatpush2.msra.mxu0 0.0
    %726 = vmatprep.subr.mxu0 0.0
    %727 = vmatpush2.msra.mxu0 0.0
    %728 = vmatprep.subr.mxu0 0.0
    %729 = vmatpush2.msra.mxu0 0.0
    %730 = vmatprep.subr.mxu0 0.0
    %731 = vmatpush2.msra.mxu0 0.0
    %732 = vmatprep.mubr.f32.mxu0 0.0
    %733 = vmatmul.mubr.f32.gmra.mxu0 %v438
    %v734 = vpop.f32.mrf.mxu0
    %v735 = vadd.f32 0.0, %v734
    %v736 = vpop.f32.mrf.mxu0
    %737 = vmatprep.mubr.f32.mxu0 0.0
    %738 = vmatmul.mubr.f32.gmra.mxu0 %v446
    %v739 = vpop.f32.mrf.mxu0
    %v740 = vadd.f32 0.0, %v739
    %v741 = vpop.f32.mrf.mxu0
    %742 = vmatprep.mubr.f32.mxu0 0.0
    %743 = vmatmul.mubr.f32.gmra.mxu0 %v441
    %v744 = vpop.f32.mrf.mxu0
    %v745 = vadd.f32 0.0, %v744
    %v746 = vpop.f32.mrf.mxu0
    %747 = vmatprep.mubr.f32.mxu0 0.0
    %748 = vmatmul.mubr.f32.gmra.mxu0 %v447
    %v749 = vpop.f32.mrf.mxu0
    %v750 = vadd.f32 0.0, %v749
    %v751 = vpop.f32.mrf.mxu0
    %752 = vdwg.mxu0
    %v753 = vadd.f32 %v633, %v735
    %v754 = vadd.f32 %v638, %v740
    %v755 = vadd.f32 %v643, %v745
    %v756 = vadd.f32 %v648, %v750
    %v757 = vld [vmem:[%s4] sm:$0x1]
    %v759 = vlaneseq
    %v760 = vshrl.u32 %v759, 7
    %v761 = vsub.s32 0, %v760
    %v762 = vrot.slane %v757, %v761
    %v764 = vadd.f32 %v753, %v762
    %v765 = vadd.f32 %v754, %v762
    %v766 = vadd.f32 %v755, %v762
    %v767 = vadd.f32 %v756, %v762
    %v768 = vadd.f32 %v764, %v62
    %v769 = vadd.f32 %v765, %v63
    %v770 = vadd.f32 %v766, %v64
    %v771 = vadd.f32 %v767, %v65
    %v772 = vmax.f32 %v768, 0.0
    %v773 = vmax.f32 %v769, 0.0
    %v774 = vmax.f32 %v770, 0.0
    %v775 = vmax.f32 %v771, 0.0
    %776 = vst [vmem:[#allocation8] sm:$0xff] %v772
    %777 = vst [vmem:[#allocation8 + $0x8] sm:$0xff] %v773
    %778 = vst [vmem:[#allocation8 + $0x10] sm:$0xff] %v774
    %779 = vst [vmem:[#allocation8 + $0x18] sm:$0xff] %v775
    // Predicated region
    $region34: #{tpu_custom_call.1} parent=1 // pred_check
      _
    $region35: #{tpu_custom_call.1} parent=1 // pred_check_branch
      %781 = sbr.rel (0) target = $region37
    $region36: #{tpu_custom_call.1} parent=1 // pred_region
      %s783 = ssub.s32 512, 512
      %784 = vsyncadd [#allocation4], %s783
      %s785 = sshll.u32 [#allocation8], 4
      %s786 = int_to_ptr.vmem [resolvable:$true] %s785
      %791 = dma.vmem_to_hbm [thread:$0]  %s786, 512, %s5, [#allocation4], 128, 128, 8
    $region37: #{tpu_custom_call.1} parent=1 // pred_fallthru
      _
    // Predicated region
    $region38: #{tpu_custom_call.1} parent=1 // pred_check
      _
    $region39: #{tpu_custom_call.1} parent=1 // pred_check_branch
      %793 = sbr.rel (0) target = $region41
    $region40: #{tpu_custom_call.1} parent=1 // pred_region
      %794 = dma.done [#allocation4], 512
    $region41: #{tpu_custom_call.1} parent=1 // pred_fallthru
      _
    %795 = vsyncpa [#allocation3], 1
    %796 = vsyncpa [#allocation6], 1
    %797 = vsyncpa [#allocation4], 1

</llo_original>
